<compile_context>
chip_gen: v5e
topology: v5e:2x2
jax: 0.10.0
libtpu: 0.0.40
codegen_flags: <defaults>
</compile_context>

<pallas_src>
import jax
import jax.numpy as jnp
from jax.experimental import pallas as pl
from jax.experimental.pallas import tpu as pltpu

# ----------------------------- module "config" ------------------------------
NOISE_TYPE = "grqc"
VCAM_COUNT = 4
CB_COUNT = 4
PARAM_RANGES = {
    "K": (0.2, 8.0),
    "Gaussian": {"slope": (0.6, 1.0), "bias": (-2.2, -1.2), "sigma": (0.1, 0.3)},
    "Row": {"slope": (0.6, 1.0), "bias": (-3.0, -2.0), "sigma": (0.1, 0.3)},
    "ColorBias": {"count": CB_COUNT, "bias": (-0.1, 0.1), "sigma": (0.0, 0.2)},
}


# ----------------------- deterministic parameter init -----------------------
def split_range(splits, rng):
    # sample_strategy == 'coverage', shuffle == False -> deterministic linspace
    lo, hi = rng
    return jnp.linspace(lo, hi, splits, dtype=jnp.float32)


def split_range_overlap(splits, rng, overlap=0.1):
    lo, hi = rng
    length = hi - lo
    i_len = length / (splits * (1.0 - overlap) + overlap)
    starts = jnp.arange(splits, dtype=jnp.float32) * (i_len * (1.0 - overlap))
    return jnp.stack([starts, starts + i_len], axis=1)  # (splits, 2)


def init_camera_params(key):
    p = {}
    p["k_range"] = jnp.asarray(PARAM_RANGES["K"], jnp.float32)
    p["read_slopes"] = split_range(VCAM_COUNT, PARAM_RANGES["Gaussian"]["slope"])
    p["read_biases"] = split_range(VCAM_COUNT, PARAM_RANGES["Gaussian"]["bias"])
    p["read_sigmas"] = split_range(VCAM_COUNT, PARAM_RANGES["Gaussian"]["sigma"])
    p["row_slopes"] = split_range(VCAM_COUNT, PARAM_RANGES["Row"]["slope"])
    p["row_biases"] = split_range(VCAM_COUNT, PARAM_RANGES["Row"]["bias"])
    p["row_sigmas"] = split_range(VCAM_COUNT, PARAM_RANGES["Row"]["sigma"])
    sig_ranges = split_range_overlap(CB_COUNT, PARAM_RANGES["ColorBias"]["sigma"], 0.1)
    kb, kn, ks = jax.random.split(key, 3)
    b_lo, b_hi = PARAM_RANGES["ColorBias"]["bias"]
    bias = jax.random.uniform(kb, (VCAM_COUNT, CB_COUNT, 1), minval=b_lo, maxval=b_hi)
    u = jax.random.uniform(ks, (VCAM_COUNT, CB_COUNT, 1))
    sig = sig_ranges[None, :, 0:1] + u * (sig_ranges[None, :, 1:2] - sig_ranges[None, :, 0:1])
    p["color_biases"] = (bias + jax.random.normal(kn, (VCAM_COUNT, CB_COUNT, 4)) * sig).astype(
        jnp.float32
    )
    return p


# ------------------------------- Pallas kernel -------------------------------
def _noise_kernel(
    img_ref,    # VMEM (4, TH, W)  clean image tile
    read_ref,   # VMEM (4, TH, W)  gaussian read noise (already * sigma)
    quant_ref,  # VMEM (4, TH, W)  uniform quant noise (already - 0.5)
    row_ref,    # VMEM (4, TH, 1)  packed-bayer per-row noise
    cb_ref,     # VMEM (4, 1, 1)   color bias
    sor_ref,    # VMEM (4, 1, 1)   scale / ratio   (divides hoisted out of kernel)
    ros_ref,    # VMEM (4, 1, 1)   ratio / scale
    gt_ref,     # out  (4, TH, W)
    lq_ref,     # out  (4, TH, W)
):
    # img_gt = clamp(img, 0, 1)
    img_gt = jnp.clip(img_ref[...], 0.0, 1.0)
    gt_ref[...] = img_gt

    # img = img_gt * scale / ratio   (multiply-only hot path)
    img_s = img_gt * sor_ref[...]

    # add_noise: img += read + row + quant + color_bias ; /= scale ; *= ratio ; clamp(max=1)
    noisy = img_s + read_ref[...] + row_ref[...] + quant_ref[...] + cb_ref[...]
    lq_ref[...] = jnp.minimum(noisy * ros_ref[...], 1.0)


def _choose_tile_h(C, H, W, bytes_per_elem=4, target_block_bytes=1 << 20):
    """Largest H-tile that (a) divides H, (b) is a multiple of 8, (c) keeps one
    block <= ~1 MiB, so ~2 bufs x (3 in + 2 out) blocks stay well under the
    16/32 MiB default scoped VMEM (and v7x's 64 MiB physical VMEM)."""
    if C * H * W * bytes_per_elem <= target_block_bytes:
        return H
    best = None
    for th in range(8, H + 1, 8):
        if H % th == 0 and C * th * W * bytes_per_elem <= target_block_bytes:
            best = th
    if best is None:
        # TODO(synk): odd H with no multiple-of-8 divisor -> fall back to full image.
        return H
    return best


def noisy_pair_pallas(img, read_noise, quant_noise, row_base, color_bias,
                      scale_over_ratio, ratio_over_scale):
    B, C, H, W = img.shape
    TH = _choose_tile_h(C, H, W)
    grid = (B, H // TH)

    # NOTE: for best lane utilisation W (the last block dim) should be a
    # multiple of 128; small demo W falls back to full-dim blocks (still legal).
    blk_img = pl.BlockSpec((None, C, TH, W), lambda b, h: (b, 0, h, 0))
    blk_row = pl.BlockSpec((None, C, TH, 1), lambda b, h: (b, 0, h, 0))
    blk_c11 = pl.BlockSpec((None, C, 1, 1), lambda b, h: (b, 0, 0, 0))

    n_elem = B * C * H * W
    cost = pl.CostEstimate(
        flops=9 * n_elem,
        transcendentals=0,
        bytes_accessed=(5 * n_elem + B * C * H + 3 * B * C) * 4,
    )

    out_shape = tuple(jax.ShapeDtypeStruct((B, C, H, W), jnp.float32) for _ in range(2))
    return pl.pallas_call(
        _noise_kernel,
        out_shape=out_shape,
        grid=grid,
        in_specs=[blk_img, blk_img, blk_img, blk_row, blk_c11, blk_c11, blk_c11],
        out_specs=[blk_img, blk_img],
        compiler_params=pltpu.CompilerParams(
            dimension_semantics=("parallel", "arbitrary")),
        cost_estimate=cost,
    )(img, read_noise, quant_noise, row_base, color_bias,
      scale_over_ratio, ratio_over_scale)


# -------------------------- forward (module wrapper) -------------------------
def forward(params, img, scale, ratio, key, vcam_id=None):
    B, C, H, W = img.shape
    k_min, k_max = params["k_range"][0], params["k_range"][1]
    keys = jax.random.split(key, 7)

    # current_camera
    if vcam_id is None:
        cam = jax.random.randint(keys[0], (B,), 0, VCAM_COUNT)
    else:
        cam = jnp.full((B,), vcam_id, dtype=jnp.int32)

    # sample_overall_system_gain: K = exp(U(log Kmin, log Kmax))
    log_k = jax.random.uniform(keys[1], (B,), minval=jnp.log(k_min), maxval=jnp.log(k_max))
    k_gain = jnp.exp(log_k)

    # sample_read_sigma: exp(N(log_K*slope + bias, sigma))
    mu_read = log_k * params["read_slopes"][cam] + params["read_biases"][cam]
    read_param = jnp.exp(jax.random.normal(keys[2], (B,)) * params["read_sigmas"][cam] + mu_read)

    # sample_row_sigma + row_noise (per (batch, bayer-row) gaussian, constant over W)
    mu_row = log_k * params["row_slopes"][cam] + params["row_biases"][cam]
    row_param = jnp.exp(jax.random.normal(keys[3], (B,)) * params["row_sigmas"][cam] + mu_row)
    rn = jax.random.normal(keys[4], (B, 2 * H)) * row_param[:, None]
    even, odd = rn[:, 0::2], rn[:, 1::2]
    # _pack_bayer of a column-repeated map: channels (0,1)->even rows, (2,3)->odd rows
    row_base = jnp.stack([even, even, odd, odd], axis=1)[..., None]  # (B,4,H,1)

    # sample_color_bias: bin K into CB_COUNT buckets, look up (camera, bucket)
    i_range = (k_max - k_min) / CB_COUNT
    cb_idx = jnp.clip(jnp.floor((k_gain - k_min) / i_range).astype(jnp.int32), 0, CB_COUNT - 1)
    color_bias = params["color_biases"][cam, cb_idx].reshape(B, 4, 1, 1).astype(jnp.float32)

    # per-pixel noise fields drawn with jax.random (TPU stateful PRNG is not
    # lowerable on the CPU/interpret path); the kernel just streams them.
    read_noise = (jax.random.normal(keys[5], (B, C, H, W))
                  * read_param[:, None, None, None]).astype(jnp.float32)
    quant_noise = (jax.random.uniform(keys[6], (B, C, H, W)) - 0.5).astype(jnp.float32)

    # hoist per-pixel divides: precompute the two per-channel gains once
    scale4 = scale.reshape(B, 4, 1, 1).astype(jnp.float32)
    ratio4 = ratio.reshape(B, 1, 1, 1).astype(jnp.float32)
    scale_over_ratio = (scale4 / ratio4).astype(jnp.float32)
    ratio_over_scale = (ratio4 / scale4).astype(jnp.float32)

    img_gt, img_lq = noisy_pair_pallas(
        img.astype(jnp.float32),
        read_noise,
        quant_noise,
        row_base.astype(jnp.float32),
        color_bias,
        scale_over_ratio,
        ratio_over_scale,
    )

    meta = {
        "vcam_id": cam,
        "noise": {
            "read": read_noise,
            # kept unbroadcast (B,4,H,1) to avoid writing a 5th full-res tensor
            # to HBM; broadcast lazily at the consumer if a full map is needed.
            "row": row_base,
            "quant": quant_noise,
            "color_bias": color_bias,
        },
        "noise_params": {
            "isp_dgain": ratio,
            "scale": scale,
            "read": read_param,
            "row": row_param,
            "K": k_gain,
        },
    }
    return img_gt, img_lq, meta


# ------------------------------------ main -----------------------------------
if __name__ == "__main__":
    key = jax.random.PRNGKey(0)
    k_param, k_img, k_scale, k_ratio, k_fwd = jax.random.split(key, 5)

    params = init_camera_params(k_param)

    B, C, H, W = 2, 4, 16, 16
    img = jax.random.uniform(k_img, (B, C, H, W), jnp.float32)                 # clean raw in [0,1]
    scale = jax.random.uniform(k_scale, (B, C), jnp.float32, minval=200.0, maxval=1000.0)
    ratio = jax.random.uniform(k_ratio, (B,), jnp.float32, minval=1.0, maxval=16.0)

    img_gt, img_lq, meta = forward(params, img, scale, ratio, k_fwd)
    jax.block_until_ready((img_gt, img_lq, meta))

    assert img_gt.shape == (B, C, H, W) and img_gt.dtype == jnp.float32
    assert img_lq.shape == (B, C, H, W) and img_lq.dtype == jnp.float32
    assert bool(jnp.all(jnp.isfinite(img_lq)))
    assert bool(jnp.all(img_lq <= 1.0))
    assert bool(jnp.all(img_gt >= 0.0)) and bool(jnp.all(img_gt <= 1.0))

    print("KERNEL_OK")
</pallas_src>

<mosaic_0001>
module attributes {stable_mosaic.version = 11 : i64} {
  func.func @_noise_kernel(%arg0: i32, %arg1: i32, %arg2: memref<1x4x16x16xf32, #tpu.memory_space<vmem>>, %arg3: memref<1x4x16x16xf32, #tpu.memory_space<vmem>>, %arg4: memref<1x4x16x16xf32, #tpu.memory_space<vmem>>, %arg5: memref<1x4x16x1xf32, #tpu.memory_space<vmem>>, %arg6: memref<1x4x1x1xf32, #tpu.memory_space<vmem>>, %arg7: memref<1x4x1x1xf32, #tpu.memory_space<vmem>>, %arg8: memref<1x4x1x1xf32, #tpu.memory_space<vmem>>, %arg9: memref<1x4x16x16xf32, #tpu.memory_space<vmem>>, %arg10: memref<1x4x16x16xf32, #tpu.memory_space<vmem>>) attributes {dimension_semantics = [#tpu.dimension_semantics<parallel>, #tpu.dimension_semantics<arbitrary>], iteration_bounds = array<i64: 2, 1>, scalar_prefetch = 0 : i64, scratch_operands = 0 : i64, tpu.core_type = #tpu.core_type<tc>, window_params = [{transform_indices = @transform_0, window_bounds = array<i64: 1, 4, 16, 16>}, {transform_indices = @transform_1, window_bounds = array<i64: 1, 4, 16, 16>}, {transform_indices = @transform_2, window_bounds = array<i64: 1, 4, 16, 16>}, {transform_indices = @transform_3, window_bounds = array<i64: 1, 4, 16, 1>}, {transform_indices = @transform_4, window_bounds = array<i64: 1, 4, 1, 1>}, {transform_indices = @transform_5, window_bounds = array<i64: 1, 4, 1, 1>}, {transform_indices = @transform_6, window_bounds = array<i64: 1, 4, 1, 1>}, {transform_indices = @transform_7, window_bounds = array<i64: 1, 4, 16, 16>}, {transform_indices = @transform_8, window_bounds = array<i64: 1, 4, 16, 16>}]} {
    %c0 = arith.constant 0 : index
    %c0_0 = arith.constant 0 : index
    %c0_1 = arith.constant 0 : index
    %c0_2 = arith.constant 0 : index
    %0 = vector.load %arg2[%c0, %c0_0, %c0_1, %c0_2] : memref<1x4x16x16xf32, #tpu.memory_space<vmem>>, vector<1x4x16x16xf32>
    %1 = vector.shape_cast %0 : vector<1x4x16x16xf32> to vector<4x16x16xf32>
    %cst = arith.constant 0.000000e+00 : f32
    %cst_3 = arith.constant 1.000000e+00 : f32
    %2 = vector.broadcast %cst : f32 to vector<4x16x16xf32>
    %3 = arith.maximumf %2, %1 : vector<4x16x16xf32>
    %4 = vector.broadcast %cst_3 : f32 to vector<4x16x16xf32>
    %5 = arith.minimumf %4, %3 : vector<4x16x16xf32>
    %c0_4 = arith.constant 0 : index
    %c0_5 = arith.constant 0 : index
    %c0_6 = arith.constant 0 : index
    %c0_7 = arith.constant 0 : index
    %6 = vector.load %arg9[%c0_4, %c0_5, %c0_6, %c0_7] : memref<1x4x16x16xf32, #tpu.memory_space<vmem>>, vector<1x4x16x16xf32>
    %7 = vector.shape_cast %6 : vector<1x4x16x16xf32> to vector<4x16x16xf32>
    %8 = vector.shape_cast %5 : vector<4x16x16xf32> to vector<1x4x16x16xf32>
    tpu.vector_store %arg9[%c0_4, %c0_5, %c0_6, %c0_7], %8 {strides = array<i32>} : memref<1x4x16x16xf32, #tpu.memory_space<vmem>>, vector<1x4x16x16xf32>,
    %c0_8 = arith.constant 0 : index
    %c0_9 = arith.constant 0 : index
    %c0_10 = arith.constant 0 : index
    %c0_11 = arith.constant 0 : index
    %9 = vector.load %arg7[%c0_8, %c0_9, %c0_10, %c0_11] : memref<1x4x1x1xf32, #tpu.memory_space<vmem>>, vector<1x4x1x1xf32>
    %10 = vector.shape_cast %9 : vector<1x4x1x1xf32> to vector<4x1x1xf32>
    %11 = vector.broadcast %10 : vector<4x1x1xf32> to vector<4x16x16xf32>
    %12 = arith.mulf %5, %11 : vector<4x16x16xf32>
    %c0_12 = arith.constant 0 : index
    %c0_13 = arith.constant 0 : index
    %c0_14 = arith.constant 0 : index
    %c0_15 = arith.constant 0 : index
    %13 = vector.load %arg3[%c0_12, %c0_13, %c0_14, %c0_15] : memref<1x4x16x16xf32, #tpu.memory_space<vmem>>, vector<1x4x16x16xf32>
    %14 = vector.shape_cast %13 : vector<1x4x16x16xf32> to vector<4x16x16xf32>
    %15 = arith.addf %12, %14 : vector<4x16x16xf32>
    %c0_16 = arith.constant 0 : index
    %c0_17 = arith.constant 0 : index
    %c0_18 = arith.constant 0 : index
    %c0_19 = arith.constant 0 : index
    %16 = vector.load %arg5[%c0_16, %c0_17, %c0_18, %c0_19] : memref<1x4x16x1xf32, #tpu.memory_space<vmem>>, vector<1x4x16x1xf32>
    %17 = vector.shape_cast %16 : vector<1x4x16x1xf32> to vector<4x16x1xf32>
    %18 = vector.broadcast %17 : vector<4x16x1xf32> to vector<4x16x16xf32>
    %19 = arith.addf %15, %18 : vector<4x16x16xf32>
    %c0_20 = arith.constant 0 : index
    %c0_21 = arith.constant 0 : index
    %c0_22 = arith.constant 0 : index
    %c0_23 = arith.constant 0 : index
    %20 = vector.load %arg4[%c0_20, %c0_21, %c0_22, %c0_23] : memref<1x4x16x16xf32, #tpu.memory_space<vmem>>, vector<1x4x16x16xf32>
    %21 = vector.shape_cast %20 : vector<1x4x16x16xf32> to vector<4x16x16xf32>
    %22 = arith.addf %19, %21 : vector<4x16x16xf32>
    %c0_24 = arith.constant 0 : index
    %c0_25 = arith.constant 0 : index
    %c0_26 = arith.constant 0 : index
    %c0_27 = arith.constant 0 : index
    %23 = vector.load %arg6[%c0_24, %c0_25, %c0_26, %c0_27] : memref<1x4x1x1xf32, #tpu.memory_space<vmem>>, vector<1x4x1x1xf32>
    %24 = vector.shape_cast %23 : vector<1x4x1x1xf32> to vector<4x1x1xf32>
    %25 = vector.broadcast %24 : vector<4x1x1xf32> to vector<4x16x16xf32>
    %26 = arith.addf %22, %25 : vector<4x16x16xf32>
    %c0_28 = arith.constant 0 : index
    %c0_29 = arith.constant 0 : index
    %c0_30 = arith.constant 0 : index
    %c0_31 = arith.constant 0 : index
    %27 = vector.load %arg8[%c0_28, %c0_29, %c0_30, %c0_31] : memref<1x4x1x1xf32, #tpu.memory_space<vmem>>, vector<1x4x1x1xf32>
    %28 = vector.shape_cast %27 : vector<1x4x1x1xf32> to vector<4x1x1xf32>
    %29 = vector.broadcast %28 : vector<4x1x1xf32> to vector<4x16x16xf32>
    %30 = arith.mulf %26, %29 : vector<4x16x16xf32>
    %cst_32 = arith.constant 1.000000e+00 : f32
    %31 = vector.broadcast %cst_32 : f32 to vector<4x16x16xf32>
    %32 = arith.minimumf %30, %31 : vector<4x16x16xf32>
    %c0_33 = arith.constant 0 : index
    %c0_34 = arith.constant 0 : index
    %c0_35 = arith.constant 0 : index
    %c0_36 = arith.constant 0 : index
    %33 = vector.load %arg10[%c0_33, %c0_34, %c0_35, %c0_36] : memref<1x4x16x16xf32, #tpu.memory_space<vmem>>, vector<1x4x16x16xf32>
    %34 = vector.shape_cast %33 : vector<1x4x16x16xf32> to vector<4x16x16xf32>
    %35 = vector.shape_cast %32 : vector<4x16x16xf32> to vector<1x4x16x16xf32>
    tpu.vector_store %arg10[%c0_33, %c0_34, %c0_35, %c0_36], %35 {strides = array<i32>} : memref<1x4x16x16xf32, #tpu.memory_space<vmem>>, vector<1x4x16x16xf32>,
    return
  }
  func.func @transform_0(%arg0: i32, %arg1: i32) -> (i32, i32, i32, i32) {
    %c0_i32 = arith.constant 0 : i32
    %c0_i32_0 = arith.constant 0 : i32
    %c0_i32_1 = arith.constant 0 : i32
    return %arg0, %c0_i32, %arg1, %c0_i32_0 : i32, i32, i32, i32
  }
  func.func @transform_1(%arg0: i32, %arg1: i32) -> (i32, i32, i32, i32) {
    %c0_i32 = arith.constant 0 : i32
    %c0_i32_0 = arith.constant 0 : i32
    %c0_i32_1 = arith.constant 0 : i32
    return %arg0, %c0_i32, %arg1, %c0_i32_0 : i32, i32, i32, i32
  }
  func.func @transform_2(%arg0: i32, %arg1: i32) -> (i32, i32, i32, i32) {
    %c0_i32 = arith.constant 0 : i32
    %c0_i32_0 = arith.constant 0 : i32
    %c0_i32_1 = arith.constant 0 : i32
    return %arg0, %c0_i32, %arg1, %c0_i32_0 : i32, i32, i32, i32
  }
  func.func @transform_3(%arg0: i32, %arg1: i32) -> (i32, i32, i32, i32) {
    %c0_i32 = arith.constant 0 : i32
    %c0_i32_0 = arith.constant 0 : i32
    %c0_i32_1 = arith.constant 0 : i32
    return %arg0, %c0_i32, %arg1, %c0_i32_0 : i32, i32, i32, i32
  }
  func.func @transform_4(%arg0: i32, %arg1: i32) -> (i32, i32, i32, i32) {
    %c0_i32 = arith.constant 0 : i32
    %c0_i32_0 = arith.constant 0 : i32
    %c0_i32_1 = arith.constant 0 : i32
    %c0_i32_2 = arith.constant 0 : i32
    return %arg0, %c0_i32, %c0_i32_0, %c0_i32_1 : i32, i32, i32, i32
  }
  func.func @transform_5(%arg0: i32, %arg1: i32) -> (i32, i32, i32, i32) {
    %c0_i32 = arith.constant 0 : i32
    %c0_i32_0 = arith.constant 0 : i32
    %c0_i32_1 = arith.constant 0 : i32
    %c0_i32_2 = arith.constant 0 : i32
    return %arg0, %c0_i32, %c0_i32_0, %c0_i32_1 : i32, i32, i32, i32
  }
  func.func @transform_6(%arg0: i32, %arg1: i32) -> (i32, i32, i32, i32) {
    %c0_i32 = arith.constant 0 : i32
    %c0_i32_0 = arith.constant 0 : i32
    %c0_i32_1 = arith.constant 0 : i32
    %c0_i32_2 = arith.constant 0 : i32
    return %arg0, %c0_i32, %c0_i32_0, %c0_i32_1 : i32, i32, i32, i32
  }
  func.func @transform_7(%arg0: i32, %arg1: i32) -> (i32, i32, i32, i32) {
    %c0_i32 = arith.constant 0 : i32
    %c0_i32_0 = arith.constant 0 : i32
    %c0_i32_1 = arith.constant 0 : i32
    return %arg0, %c0_i32, %arg1, %c0_i32_0 : i32, i32, i32, i32
  }
  func.func @transform_8(%arg0: i32, %arg1: i32) -> (i32, i32, i32, i32) {
    %c0_i32 = arith.constant 0 : i32
    %c0_i32_0 = arith.constant 0 : i32
    %c0_i32_1 = arith.constant 0 : i32
    return %arg0, %c0_i32, %arg1, %c0_i32_0 : i32, i32, i32, i32
  }
}

</mosaic_0001>

<llo_original>
// kernel: tpu_custom_call.1
$region0: #{tpu_custom_call.1}
  #allocation0 [shape = 'u32[]', space=smem, size = 0x4, offset = 0x4, fixed_abs, tag = 'smem constant byte address 0x4 - core index']
  #allocation1 [shape = 'u32[72,128]{1,0:T(1,128)}', space=vmem, size = 0x9000, scoped, tag = 'internal scratch']
  %s0 = inlined_call_operand.vmem [shape: f32[2,4,16,16], index: 0, kind: input, shape index: {}]
  %s1 = inlined_call_operand.hbm [shape: f32[2,4,16,16], index: 1, kind: input, shape index: {}]
  %s2 = inlined_call_operand.hbm [shape: f32[2,4,16,16], index: 2, kind: input, shape index: {}]
  %s3 = inlined_call_operand.vmem [shape: f32[2,4,16,1], index: 3, kind: input, shape index: {}]
  %s4 = inlined_call_operand.vmem [shape: f32[2,4,1,1], index: 4, kind: input, shape index: {}]
  %s5 = inlined_call_operand.vmem [shape: f32[2,4,1,1], index: 5, kind: input, shape index: {}]
  %s6 = inlined_call_operand.vmem [shape: f32[2,4,1,1], index: 6, kind: input, shape index: {}]
  %s7 = inlined_call_operand.hbm [shape: f32[2,4,16,16], index: 7, kind: output, shape index: {0}]
  %s8 = inlined_call_operand.hbm [shape: f32[2,4,16,16], index: 8, kind: output, shape index: {1}]
  %9 = xla_tuple %s7, %s8
  %s10 = sld [smem:[#allocation0]]
  $region77: #{tpu_custom_call.1} parent=0
    _
  %s12 = ssub.s32 1, %s10
  %s13 = scalar_select 0, %s12, %s10
  $region1: #{tpu_custom_call.1} parent=0
    #allocation2 [shape = 'u8[65536]{0}', space=vmem, size = 0x10000, scoped, tag = 'input window, operand 1']
    #allocation3 [shape = 's32[2]{0}', space=sflag, size = 0x8, scoped, tag = 'scoped memory for tpu_custom_call.1']
    #allocation4 [shape = 's32[2]{0}', space=sflag, size = 0x8, scoped, tag = 'scoped memory for tpu_custom_call.1']
    #allocation5 [shape = 'u8[65536]{0}', space=vmem, size = 0x10000, scoped, tag = 'input window, operand 2']
    #allocation6 [shape = 's32[2]{0}', space=sflag, size = 0x8, scoped, tag = 'scoped memory for tpu_custom_call.1']
    #allocation7 [shape = 'u8[65536]{0}', space=vmem, size = 0x10000, scoped, tag = 'output window, operand 0']
    #allocation8 [shape = 'u8[65536]{0}', space=vmem, size = 0x10000, scoped, tag = 'output window, operand 1']
    #allocation9 [shape = 's32[2]{0}', space=sflag, size = 0x8, scoped, tag = 'scoped memory for tpu_custom_call.1']
    %14 = vsyncpa [#allocation3], 0
    %s15 = scalar_lea.sflag [#allocation3], 1
    %16 = vsyncpa %s15, 0
    %17 = vsyncpa [#allocation6], 0
    %s18 = scalar_lea.sflag [#allocation6], 1
    %19 = vsyncpa %s18, 0
    %20 = vsyncpa [#allocation4], 0
    %s21 = scalar_lea.sflag [#allocation4], 1
    %22 = vsyncpa %s21, 0
    %23 = vsyncpa [#allocation9], 0
    %s24 = scalar_lea.sflag [#allocation9], 1
    %25 = vsyncpa %s24, 0
    loop: start=0, step=1, limit=4
    $region2: #{tpu_custom_call.1} parent=1 // loop_pre_header
      _
    $region3: #{tpu_custom_call.1} parent=1 // loop_header
      %s27 = sphi 0, %s31
      %p28 = scmp.ge.s32.totalorder %s27, 4
      %s34 = sphi 0, %s46
      %s35 = sphi 0, %s42
      %s36 = sphi 0, %s34
      %s37 = sphi 0, %s35
      %s38 = sphi 0, %s36
      %s39 = sphi 0, %s37
      %s51 = sphi 0, %s53
      %s54 = sphi 0, %s51
      %s55 = sphi 0, %s54
      %s71 = sphi 0, %s55
      %s79 = sphi 0, %s81
      %s82 = sphi 0, %s79
      %s83 = sphi 0, %s82
      %s99 = sphi 0, %s83
      %s107 = sphi 0, %s109
      %s110 = sphi 0, %s107
      %s111 = sphi 0, %s110
      %s127 = sphi 0, %s111
      %s135 = sphi 0, %s137
      %s138 = sphi 0, %s135
      %s139 = sphi 0, %s138
      %s155 = sphi 0, %s139
      %s161 = sphi 0, %s163
      %s164 = sphi 0, %s161
      %s165 = sphi 0, %s164
      %s181 = sphi 0, %s165
      %s187 = sphi 0, %s189
      %s190 = sphi 0, %s187
      %s191 = sphi 0, %s190
      %s207 = sphi 0, %s191
      %s213 = sphi 0, %s215
      %s216 = sphi 0, %s213
      %s217 = sphi 0, %s216
      %s233 = sphi 0, %s217
      %s241 = sphi 0, %s243
      %s244 = sphi 0, %s241
      %s245 = sphi 0, %s244
      %s261 = sphi 0, %s245
      %s269 = sphi 0, %s271
      %s272 = sphi 0, %s269
      %s273 = sphi 0, %s272
      %s289 = sphi 0, %s273
    $region4: #{tpu_custom_call.1} parent=1 // loop_header_branch
      %30 = sbr.rel (%p28) target = $region8
    $region5: #{tpu_custom_call.1} parent=1 // loop_body
      %s32 = ssub.s32 %s27, 1
      %s33 = ssub.s32 %s27, 2
      %s40 = sadd.s32 1, %s35
      %p41 = scmp.ge.s32.totalorder %s40, 1
      %s42 = scalar_select %p41, 0, %s40
      %s43 = sadd.s32 1, %s34
      %s44 = scalar_select %p41, %s43, %s34
      %p45 = scmp.ge.s32.totalorder %s44, 2
      %s46 = scalar_select %p45, 0, %s44
      %s47 = ssub.s32 %s34, %s46
      %s48 = ssub.s32 %s35, %s42
      %s49 = sor.u32 %s47, %s48
      %p50 = scmp.eq.s32.totalorder %s49, 0
      %s52 = sadd.s32 %s51, 1
      %s53 = scalar_select %p50, %s51, %s52
      %p56 = pneg %p50
      %p57 = scmp.eq.s32.totalorder %s27, 1
      %p58 = por %p56, %p57
      %p59 = scmp.ne.s32.totalorder %s51, %s54
      %p60 = scmp.eq.s32.totalorder %s27, 0
      %p61 = por %p59, %p60
      %p62 = scmp.ne.s32.totalorder %s51, %s54
      %p63 = scmp.eq.s32.totalorder %s32, 1
      %p64 = por %p62, %p63
      %p65 = scmp.ne.s32.totalorder %s54, %s55
      %p66 = scmp.eq.s32.totalorder %s32, 0
      %p67 = por %p65, %p66
      %p68 = scmp.ne.s32.totalorder %s54, %s55
      %p69 = scmp.eq.s32.totalorder %s33, 1
      %p70 = por %p68, %p69
      %p72 = scmp.ne.s32.totalorder %s55, %s71
      %p73 = scmp.eq.s32.totalorder %s33, 0
      %p74 = por %p72, %p73
      %s75 = ssub.s32 %s34, %s46
      %s76 = ssub.s32 %s35, %s42
      %s77 = sor.u32 %s75, %s76
      %p78 = scmp.eq.s32.totalorder %s77, 0
      %s80 = sadd.s32 %s79, 1
      %s81 = scalar_select %p78, %s79, %s80
      %p84 = pneg %p78
      %p85 = scmp.eq.s32.totalorder %s27, 1
      %p86 = por %p84, %p85
      %p87 = scmp.ne.s32.totalorder %s79, %s82
      %p88 = scmp.eq.s32.totalorder %s27, 0
      %p89 = por %p87, %p88
      %p90 = scmp.ne.s32.totalorder %s79, %s82
      %p91 = scmp.eq.s32.totalorder %s32, 1
      %p92 = por %p90, %p91
      %p93 = scmp.ne.s32.totalorder %s82, %s83
      %p94 = scmp.eq.s32.totalorder %s32, 0
      %p95 = por %p93, %p94
      %p96 = scmp.ne.s32.totalorder %s82, %s83
      %p97 = scmp.eq.s32.totalorder %s33, 1
      %p98 = por %p96, %p97
      %p100 = scmp.ne.s32.totalorder %s83, %s99
      %p101 = scmp.eq.s32.totalorder %s33, 0
      %p102 = por %p100, %p101
      %s103 = ssub.s32 %s34, %s46
      %s104 = ssub.s32 %s35, %s42
      %s105 = sor.u32 %s103, %s104
      %p106 = scmp.eq.s32.totalorder %s105, 0
      %s108 = sadd.s32 %s107, 1
      %s109 = scalar_select %p106, %s107, %s108
      %p112 = pneg %p106
      %p113 = scmp.eq.s32.totalorder %s27, 1
      %p114 = por %p112, %p113
      %p115 = scmp.ne.s32.totalorder %s107, %s110
      %p116 = scmp.eq.s32.totalorder %s27, 0
      %p117 = por %p115, %p116
      %p118 = scmp.ne.s32.totalorder %s107, %s110
      %p119 = scmp.eq.s32.totalorder %s32, 1
      %p120 = por %p118, %p119
      %p121 = scmp.ne.s32.totalorder %s110, %s111
      %p122 = scmp.eq.s32.totalorder %s32, 0
      %p123 = por %p121, %p122
      %p124 = scmp.ne.s32.totalorder %s110, %s111
      %p125 = scmp.eq.s32.totalorder %s33, 1
      %p126 = por %p124, %p125
      %p128 = scmp.ne.s32.totalorder %s111, %s127
      %p129 = scmp.eq.s32.totalorder %s33, 0
      %p130 = por %p128, %p129
      %s131 = ssub.s32 %s34, %s46
      %s132 = ssub.s32 %s35, %s42
      %s133 = sor.u32 %s131, %s132
      %p134 = scmp.eq.s32.totalorder %s133, 0
      %s136 = sadd.s32 %s135, 1
      %s137 = scalar_select %p134, %s135, %s136
      %p140 = pneg %p134
      %p141 = scmp.eq.s32.totalorder %s27, 1
      %p142 = por %p140, %p141
      %p143 = scmp.ne.s32.totalorder %s135, %s138
      %p144 = scmp.eq.s32.totalorder %s27, 0
      %p145 = por %p143, %p144
      %p146 = scmp.ne.s32.totalorder %s135, %s138
      %p147 = scmp.eq.s32.totalorder %s32, 1
      %p148 = por %p146, %p147
      %p149 = scmp.ne.s32.totalorder %s138, %s139
      %p150 = scmp.eq.s32.totalorder %s32, 0
      %p151 = por %p149, %p150
      %p152 = scmp.ne.s32.totalorder %s138, %s139
      %p153 = scmp.eq.s32.totalorder %s33, 1
      %p154 = por %p152, %p153
      %p156 = scmp.ne.s32.totalorder %s139, %s155
      %p157 = scmp.eq.s32.totalorder %s33, 0
      %p158 = por %p156, %p157
      %s159 = ssub.s32 %s34, %s46
      %p160 = scmp.eq.s32.totalorder %s159, 0
      %s162 = sadd.s32 %s161, 1
      %s163 = scalar_select %p160, %s161, %s162
      %p166 = pneg %p160
      %p167 = scmp.eq.s32.totalorder %s27, 1
      %p168 = por %p166, %p167
      %p169 = scmp.ne.s32.totalorder %s161, %s164
      %p170 = scmp.eq.s32.totalorder %s27, 0
      %p171 = por %p169, %p170
      %p172 = scmp.ne.s32.totalorder %s161, %s164
      %p173 = scmp.eq.s32.totalorder %s32, 1
      %p174 = por %p172, %p173
      %p175 = scmp.ne.s32.totalorder %s164, %s165
      %p176 = scmp.eq.s32.totalorder %s32, 0
      %p177 = por %p175, %p176
      %p178 = scmp.ne.s32.totalorder %s164, %s165
      %p179 = scmp.eq.s32.totalorder %s33, 1
      %p180 = por %p178, %p179
      %p182 = scmp.ne.s32.totalorder %s165, %s181
      %p183 = scmp.eq.s32.totalorder %s33, 0
      %p184 = por %p182, %p183
      %s185 = ssub.s32 %s34, %s46
      %p186 = scmp.eq.s32.totalorder %s185, 0
      %s188 = sadd.s32 %s187, 1
      %s189 = scalar_select %p186, %s187, %s188
      %p192 = pneg %p186
      %p193 = scmp.eq.s32.totalorder %s27, 1
      %p194 = por %p192, %p193
      %p195 = scmp.ne.s32.totalorder %s187, %s190
      %p196 = scmp.eq.s32.totalorder %s27, 0
      %p197 = por %p195, %p196
      %p198 = scmp.ne.s32.totalorder %s187, %s190
      %p199 = scmp.eq.s32.totalorder %s32, 1
      %p200 = por %p198, %p199
      %p201 = scmp.ne.s32.totalorder %s190, %s191
      %p202 = scmp.eq.s32.totalorder %s32, 0
      %p203 = por %p201, %p202
      %p204 = scmp.ne.s32.totalorder %s190, %s191
      %p205 = scmp.eq.s32.totalorder %s33, 1
      %p206 = por %p204, %p205
      %p208 = scmp.ne.s32.totalorder %s191, %s207
      %p209 = scmp.eq.s32.totalorder %s33, 0
      %p210 = por %p208, %p209
      %s211 = ssub.s32 %s34, %s46
      %p212 = scmp.eq.s32.totalorder %s211, 0
      %s214 = sadd.s32 %s213, 1
      %s215 = scalar_select %p212, %s213, %s214
      %p218 = pneg %p212
      %p219 = scmp.eq.s32.totalorder %s27, 1
      %p220 = por %p218, %p219
      %p221 = scmp.ne.s32.totalorder %s213, %s216
      %p222 = scmp.eq.s32.totalorder %s27, 0
      %p223 = por %p221, %p222
      %p224 = scmp.ne.s32.totalorder %s213, %s216
      %p225 = scmp.eq.s32.totalorder %s32, 1
      %p226 = por %p224, %p225
      %p227 = scmp.ne.s32.totalorder %s216, %s217
      %p228 = scmp.eq.s32.totalorder %s32, 0
      %p229 = por %p227, %p228
      %p230 = scmp.ne.s32.totalorder %s216, %s217
      %p231 = scmp.eq.s32.totalorder %s33, 1
      %p232 = por %p230, %p231
      %p234 = scmp.ne.s32.totalorder %s217, %s233
      %p235 = scmp.eq.s32.totalorder %s33, 0
      %p236 = por %p234, %p235
      %s237 = ssub.s32 %s34, %s46
      %s238 = ssub.s32 %s35, %s42
      %s239 = sor.u32 %s237, %s238
      %p240 = scmp.eq.s32.totalorder %s239, 0
      %s242 = sadd.s32 %s241, 1
      %s243 = scalar_select %p240, %s241, %s242
      %p246 = pneg %p240
      %p247 = scmp.eq.s32.totalorder %s27, 1
      %p248 = por %p246, %p247
      %p249 = scmp.ne.s32.totalorder %s241, %s244
      %p250 = scmp.eq.s32.totalorder %s27, 0
      %p251 = por %p249, %p250
      %p252 = scmp.ne.s32.totalorder %s241, %s244
      %p253 = scmp.eq.s32.totalorder %s32, 1
      %p254 = por %p252, %p253
      %p255 = scmp.ne.s32.totalorder %s244, %s245
      %p256 = scmp.eq.s32.totalorder %s32, 0
      %p257 = por %p255, %p256
      %p258 = scmp.ne.s32.totalorder %s244, %s245
      %p259 = scmp.eq.s32.totalorder %s33, 1
      %p260 = por %p258, %p259
      %p262 = scmp.ne.s32.totalorder %s245, %s261
      %p263 = scmp.eq.s32.totalorder %s33, 0
      %p264 = por %p262, %p263
      %s265 = ssub.s32 %s34, %s46
      %s266 = ssub.s32 %s35, %s42
      %s267 = sor.u32 %s265, %s266
      %p268 = scmp.eq.s32.totalorder %s267, 0
      %s270 = sadd.s32 %s269, 1
      %s271 = scalar_select %p268, %s269, %s270
      %p274 = pneg %p268
      %p275 = scmp.eq.s32.totalorder %s27, 1
      %p276 = por %p274, %p275
      %p277 = scmp.ne.s32.totalorder %s269, %s272
      %p278 = scmp.eq.s32.totalorder %s27, 0
      %p279 = por %p277, %p278
      %p280 = scmp.ne.s32.totalorder %s269, %s272
      %p281 = scmp.eq.s32.totalorder %s32, 1
      %p282 = por %p280, %p281
      %p283 = scmp.ne.s32.totalorder %s272, %s273
      %p284 = scmp.eq.s32.totalorder %s32, 0
      %p285 = por %p283, %p284
      %p286 = scmp.ne.s32.totalorder %s272, %s273
      %p287 = scmp.eq.s32.totalorder %s33, 1
      %p288 = por %p286, %p287
      %p290 = scmp.ne.s32.totalorder %s273, %s289
      %p291 = scmp.eq.s32.totalorder %s33, 0
      %p292 = por %p290, %p291
      %p293 = scmp.le.s32.totalorder 1, %s27
      %p294 = scmp.lt.s32.totalorder %s27, 3
      %p295 = pnand %p293, %p294
      %p296 = pneg %p295
      // Predicated region
      $region9: #{tpu_custom_call.1} parent=5 // pred_check
        _
      $region10: #{tpu_custom_call.1} parent=5 // pred_check_branch
        %298 = sbr.rel (%p295) target = $region12
      $region11: #{tpu_custom_call.1} parent=5 // pred_region
        %s299 = ssub.s32 %s27, 1
      $region12: #{tpu_custom_call.1} parent=5 // pred_fallthru
        _
      %p300 = scmp.lt.s32.totalorder %s27, 2
      // Predicated region
      $region13: #{tpu_custom_call.1} parent=5 // pred_check
        %p301 = pneg %p300
      $region14: #{tpu_custom_call.1} parent=5 // pred_check_branch
        %303 = sbr.rel (%p301) target = $region16
      $region15: #{tpu_custom_call.1} parent=5 // pred_region
        // Predicated region
        $region17: #{tpu_custom_call.1} parent=15 // pred_check
          %p304 = pneg %p61
        $region18: #{tpu_custom_call.1} parent=15 // pred_check_branch
          %306 = sbr.rel (%p304) target = $region20
        $region19: #{tpu_custom_call.1} parent=15 // pred_region
          %s307 = smul.u32 2, %s35
          %p308 = scmp.lt.s32.totalorder %s34, 1
          %s309 = scalar_select %p308, %s34, 1
          %p310 = scmp.lt.s32.totalorder %s307, 1
          %s311 = scalar_select %p310, %s307, 1
          %s312 = smul.addr %s309, 8
          %s313 = sadd.s32 %s311, %s312
          %s314 = smul.addr %s313, 8
          %s315 = scalar_lea.vmem %s0, %s314
          %s316 = smul.u32 2, %s35
        $region20: #{tpu_custom_call.1} parent=15 // pred_fallthru
          _
        // Predicated region
        $region21: #{tpu_custom_call.1} parent=15 // pred_check
          %p317 = pneg %p89
        $region22: #{tpu_custom_call.1} parent=15 // pred_check_branch
          %319 = sbr.rel (%p317) target = $region24
        $region23: #{tpu_custom_call.1} parent=15 // pred_region
          %s320 = sand.u32 %s79, 1
          %s321 = scalar_lea.sflag [#allocation3], %s320
          %s322 = sand.u32 %s79, 1
          %s323 = smul.addr %s322, 64
          %s324 = scalar_lea.vmem [#allocation2], %s323
          %s325 = smul.u32 2, %s35
          %327 = vsyncadd %s321, 0
          %s328 = smul.addr %s34, 8
          %s329 = sadd.s32 %s325, %s328
          %s330 = smul.addr %s329, 8
          %s331 = scalar_lea.hbm %s1, %s330
          %s332 = sshll.u32 %s331, 4
          %s333 = int_to_ptr.hbm [resolvable:$true] %s332
          %s334 = sshll.u32 %s324, 4
          %s335 = int_to_ptr.vmem [resolvable:$true] %s334
          %340 = dma.hbm_to_vmem [thread:$0]  %s333, 1024, %s335, %s321, 128, 128, 8
        $region24: #{tpu_custom_call.1} parent=15 // pred_fallthru
          _
        // Predicated region
        $region25: #{tpu_custom_call.1} parent=15 // pred_check
          %p341 = pneg %p117
        $region26: #{tpu_custom_call.1} parent=15 // pred_check_branch
          %343 = sbr.rel (%p341) target = $region28
        $region27: #{tpu_custom_call.1} parent=15 // pred_region
          %s344 = sand.u32 %s107, 1
          %s345 = scalar_lea.sflag [#allocation6], %s344
          %s346 = sand.u32 %s107, 1
          %s347 = smul.addr %s346, 64
          %s348 = scalar_lea.vmem [#allocation5], %s347
          %s349 = smul.u32 2, %s35
          %351 = vsyncadd %s345, 0
          %s352 = smul.addr %s34, 8
          %s353 = sadd.s32 %s349, %s352
          %s354 = smul.addr %s353, 8
          %s355 = scalar_lea.hbm %s2, %s354
          %s356 = sshll.u32 %s355, 4
          %s357 = int_to_ptr.hbm [resolvable:$true] %s356
          %s358 = sshll.u32 %s348, 4
          %s359 = int_to_ptr.vmem [resolvable:$true] %s358
          %364 = dma.hbm_to_vmem [thread:$0]  %s357, 1024, %s359, %s345, 128, 128, 8
        $region28: #{tpu_custom_call.1} parent=15 // pred_fallthru
          _
        // Predicated region
        $region29: #{tpu_custom_call.1} parent=15 // pred_check
          %p365 = pneg %p145
        $region30: #{tpu_custom_call.1} parent=15 // pred_check_branch
          %367 = sbr.rel (%p365) target = $region32
        $region31: #{tpu_custom_call.1} parent=15 // pred_region
          %s368 = smul.u32 2, %s35
          %p369 = scmp.lt.s32.totalorder %s34, 1
          %s370 = scalar_select %p369, %s34, 1
          %p371 = scmp.lt.s32.totalorder %s368, 1
          %s372 = scalar_select %p371, %s368, 1
          %s373 = smul.addr %s370, 8
          %s374 = sadd.s32 %s372, %s373
          %s375 = smul.addr %s374, 8
          %s376 = scalar_lea.vmem %s3, %s375
          %s377 = smul.u32 2, %s35
        $region32: #{tpu_custom_call.1} parent=15 // pred_fallthru
          _
        // Predicated region
        $region33: #{tpu_custom_call.1} parent=15 // pred_check
          %p378 = pneg %p171
        $region34: #{tpu_custom_call.1} parent=15 // pred_check_branch
          %380 = sbr.rel (%p378) target = $region36
        $region35: #{tpu_custom_call.1} parent=15 // pred_region
          %p381 = scmp.lt.s32.totalorder %s34, 1
          %s382 = scalar_select %p381, %s34, 1
          %s383 = smul.addr %s382, 4
          %s384 = scalar_lea.vmem %s4, %s383
        $region36: #{tpu_custom_call.1} parent=15 // pred_fallthru
          _
        // Predicated region
        $region37: #{tpu_custom_call.1} parent=15 // pred_check
          %p385 = pneg %p197
        $region38: #{tpu_custom_call.1} parent=15 // pred_check_branch
          %387 = sbr.rel (%p385) target = $region40
        $region39: #{tpu_custom_call.1} parent=15 // pred_region
          %p388 = scmp.lt.s32.totalorder %s34, 1
          %s389 = scalar_select %p388, %s34, 1
          %s390 = smul.addr %s389, 4
          %s391 = scalar_lea.vmem %s5, %s390
        $region40: #{tpu_custom_call.1} parent=15 // pred_fallthru
          _
        // Predicated region
        $region41: #{tpu_custom_call.1} parent=15 // pred_check
          %p392 = pneg %p223
        $region42: #{tpu_custom_call.1} parent=15 // pred_check_branch
          %394 = sbr.rel (%p392) target = $region44
        $region43: #{tpu_custom_call.1} parent=15 // pred_region
          %p395 = scmp.lt.s32.totalorder %s34, 1
          %s396 = scalar_select %p395, %s34, 1
          %s397 = smul.addr %s396, 4
          %s398 = scalar_lea.vmem %s6, %s397
        $region44: #{tpu_custom_call.1} parent=15 // pred_fallthru
          _
      $region16: #{tpu_custom_call.1} parent=5 // pred_fallthru
        _
      %p399 = scmp.le.s32.totalorder 1, %s27
      %p400 = scmp.lt.s32.totalorder %s27, 3
      %p401 = pnand %p399, %p400
      %p402 = pneg %p401
      // Predicated region
      $region45: #{tpu_custom_call.1} parent=5 // pred_check
        _
      $region46: #{tpu_custom_call.1} parent=5 // pred_check_branch
        %404 = sbr.rel (%p401) target = $region48
      $region47: #{tpu_custom_call.1} parent=5 // pred_region
        %s405 = ssub.s32 %s27, 1
        %s406 = sand.u32 %s82, 1
        %s407 = scalar_lea.sflag [#allocation3], %s406
        %s408 = sand.u32 %s82, 1
        %s409 = smul.addr %s408, 64
        %s410 = scalar_lea.vmem [#allocation2], %s409
        // Predicated region
        $region49: #{tpu_custom_call.1} parent=47 // pred_check
          %p411 = pneg %p95
        $region50: #{tpu_custom_call.1} parent=47 // pred_check_branch
          %413 = sbr.rel (%p411) target = $region52
        $region51: #{tpu_custom_call.1} parent=47 // pred_region
          %415 = dma.done %s407, 1024
        $region52: #{tpu_custom_call.1} parent=47 // pred_fallthru
          _
        %s416 = sand.u32 %s110, 1
        %s417 = scalar_lea.sflag [#allocation6], %s416
        %s418 = sand.u32 %s110, 1
        %s419 = smul.addr %s418, 64
        %s420 = scalar_lea.vmem [#allocation5], %s419
        // Predicated region
        $region53: #{tpu_custom_call.1} parent=47 // pred_check
          %p421 = pneg %p123
        $region54: #{tpu_custom_call.1} parent=47 // pred_check_branch
          %423 = sbr.rel (%p421) target = $region56
        $region55: #{tpu_custom_call.1} parent=47 // pred_region
          %425 = dma.done %s417, 1024
        $region56: #{tpu_custom_call.1} parent=47 // pred_fallthru
          _
        %s426 = smul.u32 2, %s37
        %p427 = scmp.lt.s32.totalorder %s36, 1
        %s428 = scalar_select %p427, %s36, 1
        %p429 = scmp.lt.s32.totalorder %s426, 1
        %s430 = scalar_select %p429, %s426, 1
        %s431 = smul.addr %s428, 8
        %s432 = sadd.s32 %s430, %s431
        %s433 = smul.addr %s432, 8
        %s434 = scalar_lea.vmem %s0, %s433
        %p435 = pneg %p67
        %p436 = pneg %p64
        %s437 = sand.u32 %s82, 1
        %s438 = scalar_lea.sflag [#allocation3], %s437
        %s439 = sand.u32 %s82, 1
        %s440 = smul.addr %s439, 64
        %s441 = scalar_lea.vmem [#allocation2], %s440
        %p442 = pneg %p95
        %p443 = pneg %p92
        %s444 = sand.u32 %s110, 1
        %s445 = scalar_lea.sflag [#allocation6], %s444
        %s446 = sand.u32 %s110, 1
        %s447 = smul.addr %s446, 64
        %s448 = scalar_lea.vmem [#allocation5], %s447
        %p449 = pneg %p123
        %p450 = pneg %p120
        %s451 = smul.u32 2, %s37
        %p452 = scmp.lt.s32.totalorder %s36, 1
        %s453 = scalar_select %p452, %s36, 1
        %p454 = scmp.lt.s32.totalorder %s451, 1
        %s455 = scalar_select %p454, %s451, 1
        %s456 = smul.addr %s453, 8
        %s457 = sadd.s32 %s455, %s456
        %s458 = smul.addr %s457, 8
        %s459 = scalar_lea.vmem %s3, %s458
        %p460 = pneg %p151
        %p461 = pneg %p148
        %p462 = scmp.lt.s32.totalorder %s36, 1
        %s463 = scalar_select %p462, %s36, 1
        %s464 = smul.addr %s463, 4
        %s465 = scalar_lea.vmem %s4, %s464
        %p466 = pneg %p177
        %p467 = pneg %p174
        %p468 = scmp.lt.s32.totalorder %s36, 1
        %s469 = scalar_select %p468, %s36, 1
        %s470 = smul.addr %s469, 4
        %s471 = scalar_lea.vmem %s5, %s470
        %p472 = pneg %p203
        %p473 = pneg %p200
        %p474 = scmp.lt.s32.totalorder %s36, 1
        %s475 = scalar_select %p474, %s36, 1
        %s476 = smul.addr %s475, 4
        %s477 = scalar_lea.vmem %s6, %s476
        %p478 = pneg %p229
        %p479 = pneg %p226
        %p480 = pneg %p257
        %p481 = pneg %p254
        %s482 = sand.u32 %s244, 1
        %s483 = scalar_lea.sflag [#allocation4], %s482
        %s484 = sand.u32 %s244, 1
        %s485 = smul.addr %s484, 64
        %s486 = scalar_lea.vmem [#allocation7], %s485
        %p487 = pneg %p285
        %p488 = pneg %p282
        %s489 = sand.u32 %s272, 1
        %s490 = scalar_lea.sflag [#allocation9], %s489
        %s491 = sand.u32 %s272, 1
        %s492 = smul.addr %s491, 64
        %s493 = scalar_lea.vmem [#allocation8], %s492
        %s494 = smul.u32 2, %s37
        %p495 = scmp.lt.s32.totalorder %s36, 1
        %s496 = scalar_select %p495, %s36, 1
        %p497 = scmp.lt.s32.totalorder %s494, 1
        %s498 = scalar_select %p497, %s494, 1
        %s499 = smul.addr %s496, 8
        %s500 = sadd.s32 %s498, %s499
        %s501 = smul.addr %s500, 8
        %s502 = scalar_lea.vmem %s0, %s501
        %s503 = smul.u32 2, %s37
        %s504 = smul.u32 2, %s37
        %s505 = smul.u32 2, %s37
        %s506 = smul.u32 2, %s37
        %p507 = scmp.lt.s32.totalorder %s36, 1
        %s508 = scalar_select %p507, %s36, 1
        %p509 = scmp.lt.s32.totalorder %s506, 1
        %s510 = scalar_select %p509, %s506, 1
        %s511 = smul.addr %s508, 8
        %s512 = sadd.s32 %s510, %s511
        %s513 = smul.addr %s512, 8
        %s514 = scalar_lea.vmem %s3, %s513
        %s515 = smul.u32 2, %s37
        %p516 = scmp.lt.s32.totalorder %s36, 1
        %s517 = scalar_select %p516, %s36, 1
        %s518 = smul.addr %s517, 4
        %s519 = scalar_lea.vmem %s4, %s518
        %p520 = scmp.lt.s32.totalorder %s36, 1
        %s521 = scalar_select %p520, %s36, 1
        %s522 = smul.addr %s521, 4
        %s523 = scalar_lea.vmem %s5, %s522
        %p524 = scmp.lt.s32.totalorder %s36, 1
        %s525 = scalar_select %p524, %s36, 1
        %s526 = smul.addr %s525, 4
        %s527 = scalar_lea.vmem %s6, %s526
        %s528 = smul.u32 2, %s37
        %s529 = smul.u32 2, %s37
        %v530 = vld [vmem:[%s502] sm:$0xff]
        %v531 = vld [vmem:[%s502 + $0x8] sm:$0xff]
        %v532 = vld [vmem:[%s502 + $0x10] sm:$0xff]
        %v533 = vld [vmem:[%s502 + $0x18] sm:$0xff]
        %v534 = vld [vmem:[%s502 + $0x20] sm:$0xff]
        %v535 = vld [vmem:[%s502 + $0x28] sm:$0xff]
        %v536 = vld [vmem:[%s502 + $0x30] sm:$0xff]
        %v537 = vld [vmem:[%s502 + $0x38] sm:$0xff]
        %v538 = vmax.f32 %v530, 0.0
        %v539 = vmax.f32 %v531, 0.0
        %v540 = vmax.f32 %v532, 0.0
        %v541 = vmax.f32 %v533, 0.0
        %v542 = vmax.f32 %v534, 0.0
        %v543 = vmax.f32 %v535, 0.0
        %v544 = vmax.f32 %v536, 0.0
        %v545 = vmax.f32 %v537, 0.0
        %v546 = vmin.f32 %v538, 1.0
        %v547 = vmin.f32 %v539, 1.0
        %v548 = vmin.f32 %v540, 1.0
        %v549 = vmin.f32 %v541, 1.0
        %v550 = vmin.f32 %v542, 1.0
        %v551 = vmin.f32 %v543, 1.0
        %v552 = vmin.f32 %v544, 1.0
        %v553 = vmin.f32 %v545, 1.0
        %vm554 = vcmask 130048
        %555 = vst.msk [vmem:[%s486] sm:$0xff] %vm554, %v546
        %556 = vst.msk [vmem:[%s486 + $0x8] sm:$0xff] %vm554, %v547
        %557 = vst.msk [vmem:[%s486 + $0x10] sm:$0xff] %vm554, %v548
        %558 = vst.msk [vmem:[%s486 + $0x18] sm:$0xff] %vm554, %v549
        %559 = vst.msk [vmem:[%s486 + $0x20] sm:$0xff] %vm554, %v550
        %560 = vst.msk [vmem:[%s486 + $0x28] sm:$0xff] %vm554, %v551
        %561 = vst.msk [vmem:[%s486 + $0x30] sm:$0xff] %vm554, %v552
        %562 = vst.msk [vmem:[%s486 + $0x38] sm:$0xff] %vm554, %v553
        %v563 = vld [vmem:[%s523] sm:$0x1]
        %v564 = vld [vmem:[%s523 + $0x1] sm:$0x1]
        %v565 = vld [vmem:[%s523 + $0x2] sm:$0x1]
        %v566 = vld [vmem:[%s523 + $0x3] sm:$0x1]
        %v571 = vperm.slane %v563, 0
        %v572 = vperm.slane %v564, 0
        %v573 = vperm.slane %v565, 0
        %v574 = vperm.slane %v566, 0
        %575 = vset.pattern.permute.xlu0 0
        %576 = vperm.xlu0 %575, %v571
        %v577 = vpop.permute.xlu0 %576
        %579 = vset.pattern.permute.xlu0 0
        %580 = vperm.xlu0 %579, %v572
        %v581 = vpop.permute.xlu0 %580
        %583 = vset.pattern.permute.xlu0 0
        %584 = vperm.xlu0 %583, %v573
        %v585 = vpop.permute.xlu0 %584
        %587 = vset.pattern.permute.xlu0 0
        %588 = vperm.xlu0 %587, %v574
        %v589 = vpop.permute.xlu0 %588
        %v591 = vmul.f32 %v546, %v577
        %v592 = vmul.f32 %v547, %v577
        %v593 = vmul.f32 %v548, %v581
        %v594 = vmul.f32 %v549, %v581
        %v595 = vmul.f32 %v550, %v585
        %v596 = vmul.f32 %v551, %v585
        %v597 = vmul.f32 %v552, %v589
        %v598 = vmul.f32 %v553, %v589
        %v599 = vld [vmem:[%s410] sm:$0xff]
        %v600 = vld [vmem:[%s410 + $0x8] sm:$0xff]
        %v601 = vld [vmem:[%s410 + $0x10] sm:$0xff]
        %v602 = vld [vmem:[%s410 + $0x18] sm:$0xff]
        %v603 = vld [vmem:[%s410 + $0x20] sm:$0xff]
        %v604 = vld [vmem:[%s410 + $0x28] sm:$0xff]
        %v605 = vld [vmem:[%s410 + $0x30] sm:$0xff]
        %v606 = vld [vmem:[%s410 + $0x38] sm:$0xff]
        %v607 = vadd.f32 %v591, %v599
        %v608 = vadd.f32 %v592, %v600
        %v609 = vadd.f32 %v593, %v601
        %v610 = vadd.f32 %v594, %v602
        %v611 = vadd.f32 %v595, %v603
        %v612 = vadd.f32 %v596, %v604
        %v613 = vadd.f32 %v597, %v605
        %v614 = vadd.f32 %v598, %v606
        %v615 = vld [vmem:[%s514] sm:$0xff]
        %v616 = vld [vmem:[%s514 + $0x8] sm:$0xff]
        %v617 = vld [vmem:[%s514 + $0x10] sm:$0xff]
        %v618 = vld [vmem:[%s514 + $0x18] sm:$0xff]
        %v619 = vld [vmem:[%s514 + $0x20] sm:$0xff]
        %v620 = vld [vmem:[%s514 + $0x28] sm:$0xff]
        %v621 = vld [vmem:[%s514 + $0x30] sm:$0xff]
        %v622 = vld [vmem:[%s514 + $0x38] sm:$0xff]
        %624 = vset.pattern.permute.xlu0 0
        %625 = vperm.xlu0 %624, %v615
        %v626 = vpop.permute.xlu0 %625
        %629 = vset.pattern.permute.xlu0 0
        %630 = vperm.xlu0 %629, %v616
        %v631 = vpop.permute.xlu0 %630
        %634 = vset.pattern.permute.xlu0 0
        %635 = vperm.xlu0 %634, %v617
        %v636 = vpop.permute.xlu0 %635
        %639 = vset.pattern.permute.xlu0 0
        %640 = vperm.xlu0 %639, %v618
        %v641 = vpop.permute.xlu0 %640
        %644 = vset.pattern.permute.xlu0 0
        %645 = vperm.xlu0 %644, %v619
        %v646 = vpop.permute.xlu0 %645
        %649 = vset.pattern.permute.xlu0 0
        %650 = vperm.xlu0 %649, %v620
        %v651 = vpop.permute.xlu0 %650
        %654 = vset.pattern.permute.xlu0 0
        %655 = vperm.xlu0 %654, %v621
        %v656 = vpop.permute.xlu0 %655
        %659 = vset.pattern.permute.xlu0 0
        %660 = vperm.xlu0 %659, %v622
        %v661 = vpop.permute.xlu0 %660
        %v663 = vadd.f32 %v607, %v626
        %v664 = vadd.f32 %v608, %v631
        %v665 = vadd.f32 %v609, %v636
        %v666 = vadd.f32 %v610, %v641
        %v667 = vadd.f32 %v611, %v646
        %v668 = vadd.f32 %v612, %v651
        %v669 = vadd.f32 %v613, %v656
        %v670 = vadd.f32 %v614, %v661
        %v671 = vld [vmem:[%s420] sm:$0xff]
        %v672 = vld [vmem:[%s420 + $0x8] sm:$0xff]
        %v673 = vld [vmem:[%s420 + $0x10] sm:$0xff]
        %v674 = vld [vmem:[%s420 + $0x18] sm:$0xff]
        %v675 = vld [vmem:[%s420 + $0x20] sm:$0xff]
        %v676 = vld [vmem:[%s420 + $0x28] sm:$0xff]
        %v677 = vld [vmem:[%s420 + $0x30] sm:$0xff]
        %v678 = vld [vmem:[%s420 + $0x38] sm:$0xff]
        %v679 = vadd.f32 %v663, %v671
        %v680 = vadd.f32 %v664, %v672
        %v681 = vadd.f32 %v665, %v673
        %v682 = vadd.f32 %v666, %v674
        %v683 = vadd.f32 %v667, %v675
        %v684 = vadd.f32 %v668, %v676
        %v685 = vadd.f32 %v669, %v677
        %v686 = vadd.f32 %v670, %v678
        %v687 = vld [vmem:[%s519] sm:$0x1]
        %v688 = vld [vmem:[%s519 + $0x1] sm:$0x1]
        %v689 = vld [vmem:[%s519 + $0x2] sm:$0x1]
        %v690 = vld [vmem:[%s519 + $0x3] sm:$0x1]
        %v695 = vperm.slane %v687, 0
        %v696 = vperm.slane %v688, 0
        %v697 = vperm.slane %v689, 0
        %v698 = vperm.slane %v690, 0
        %699 = vset.pattern.permute.xlu0 0
        %700 = vperm.xlu0 %699, %v695
        %v701 = vpop.permute.xlu0 %700
        %703 = vset.pattern.permute.xlu0 0
        %704 = vperm.xlu0 %703, %v696
        %v705 = vpop.permute.xlu0 %704
        %707 = vset.pattern.permute.xlu0 0
        %708 = vperm.xlu0 %707, %v697
        %v709 = vpop.permute.xlu0 %708
        %711 = vset.pattern.permute.xlu0 0
        %712 = vperm.xlu0 %711, %v698
        %v713 = vpop.permute.xlu0 %712
        %v715 = vadd.f32 %v679, %v701
        %v716 = vadd.f32 %v680, %v701
        %v717 = vadd.f32 %v681, %v705
        %v718 = vadd.f32 %v682, %v705
        %v719 = vadd.f32 %v683, %v709
        %v720 = vadd.f32 %v684, %v709
        %v721 = vadd.f32 %v685, %v713
        %v722 = vadd.f32 %v686, %v713
        %v723 = vld [vmem:[%s527] sm:$0x1]
        %v724 = vld [vmem:[%s527 + $0x1] sm:$0x1]
        %v725 = vld [vmem:[%s527 + $0x2] sm:$0x1]
        %v726 = vld [vmem:[%s527 + $0x3] sm:$0x1]
        %v731 = vperm.slane %v723, 0
        %v732 = vperm.slane %v724, 0
        %v733 = vperm.slane %v725, 0
        %v734 = vperm.slane %v726, 0
        %735 = vset.pattern.permute.xlu0 0
        %736 = vperm.xlu0 %735, %v731
        %v737 = vpop.permute.xlu0 %736
        %739 = vset.pattern.permute.xlu0 0
        %740 = vperm.xlu0 %739, %v732
        %v741 = vpop.permute.xlu0 %740
        %743 = vset.pattern.permute.xlu0 0
        %744 = vperm.xlu0 %743, %v733
        %v745 = vpop.permute.xlu0 %744
        %747 = vset.pattern.permute.xlu0 0
        %748 = vperm.xlu0 %747, %v734
        %v749 = vpop.permute.xlu0 %748
        %v751 = vmul.f32 %v715, %v737
        %v752 = vmul.f32 %v716, %v737
        %v753 = vmul.f32 %v717, %v741
        %v754 = vmul.f32 %v718, %v741
        %v755 = vmul.f32 %v719, %v745
        %v756 = vmul.f32 %v720, %v745
        %v757 = vmul.f32 %v721, %v749
        %v758 = vmul.f32 %v722, %v749
        %v759 = vmin.f32 %v751, 1.0
        %v760 = vmin.f32 %v752, 1.0
        %v761 = vmin.f32 %v753, 1.0
        %v762 = vmin.f32 %v754, 1.0
        %v763 = vmin.f32 %v755, 1.0
        %v764 = vmin.f32 %v756, 1.0
        %v765 = vmin.f32 %v757, 1.0
        %v766 = vmin.f32 %v758, 1.0
        %767 = vst.msk [vmem:[%s493] sm:$0xff] %vm554, %v759
        %768 = vst.msk [vmem:[%s493 + $0x8] sm:$0xff] %vm554, %v760
        %769 = vst.msk [vmem:[%s493 + $0x10] sm:$0xff] %vm554, %v761
        %770 = vst.msk [vmem:[%s493 + $0x18] sm:$0xff] %vm554, %v762
        %771 = vst.msk [vmem:[%s493 + $0x20] sm:$0xff] %vm554, %v763
        %772 = vst.msk [vmem:[%s493 + $0x28] sm:$0xff] %vm554, %v764
        %773 = vst.msk [vmem:[%s493 + $0x30] sm:$0xff] %vm554, %v765
        %774 = vst.msk [vmem:[%s493 + $0x38] sm:$0xff] %vm554, %v766
        %s775 = sand.u32 %s244, 1
        %s776 = scalar_lea.sflag [#allocation4], %s775
        %s777 = sand.u32 %s244, 1
        %s778 = smul.addr %s777, 64
        %s779 = scalar_lea.vmem [#allocation7], %s778
        %s780 = sand.u32 %s272, 1
        %s781 = scalar_lea.sflag [#allocation9], %s780
        %s782 = sand.u32 %s272, 1
        %s783 = smul.addr %s782, 64
        %s784 = scalar_lea.vmem [#allocation8], %s783
        // Predicated region
        $region57: #{tpu_custom_call.1} parent=47 // pred_check
          %p785 = pneg %p254
        $region58: #{tpu_custom_call.1} parent=47 // pred_check_branch
          %787 = sbr.rel (%p785) target = $region60
        $region59: #{tpu_custom_call.1} parent=47 // pred_region
          %s788 = smul.u32 2, %s37
          %790 = vsyncadd %s776, 0
          %s791 = smul.addr %s36, 8
          %s792 = sadd.s32 %s788, %s791
          %s793 = smul.addr %s792, 8
          %s794 = scalar_lea.hbm %s7, %s793
          %s795 = sshll.u32 %s779, 4
          %s796 = int_to_ptr.vmem [resolvable:$true] %s795
          %s797 = sshll.u32 %s794, 4
          %s798 = int_to_ptr.hbm [resolvable:$true] %s797
          %803 = dma.vmem_to_hbm [thread:$0]  %s796, 1024, %s798, %s776, 128, 128, 8
        $region60: #{tpu_custom_call.1} parent=47 // pred_fallthru
          _
        // Predicated region
        $region61: #{tpu_custom_call.1} parent=47 // pred_check
          %p804 = pneg %p282
        $region62: #{tpu_custom_call.1} parent=47 // pred_check_branch
          %806 = sbr.rel (%p804) target = $region64
        $region63: #{tpu_custom_call.1} parent=47 // pred_region
          %s807 = smul.u32 2, %s37
          %809 = vsyncadd %s781, 0
          %s810 = smul.addr %s36, 8
          %s811 = sadd.s32 %s807, %s810
          %s812 = smul.addr %s811, 8
          %s813 = scalar_lea.hbm %s8, %s812
          %s814 = sshll.u32 %s784, 4
          %s815 = int_to_ptr.vmem [resolvable:$true] %s814
          %s816 = sshll.u32 %s813, 4
          %s817 = int_to_ptr.hbm [resolvable:$true] %s816
          %822 = dma.vmem_to_hbm [thread:$0]  %s815, 1024, %s817, %s781, 128, 128, 8
        $region64: #{tpu_custom_call.1} parent=47 // pred_fallthru
          _
      $region48: #{tpu_custom_call.1} parent=5 // pred_fallthru
        _
      %p823 = scmp.le.s32.totalorder 2, %s27
      // Predicated region
      $region65: #{tpu_custom_call.1} parent=5 // pred_check
        %p824 = pneg %p823
      $region66: #{tpu_custom_call.1} parent=5 // pred_check_branch
        %826 = sbr.rel (%p824) target = $region68
      $region67: #{tpu_custom_call.1} parent=5 // pred_region
        %s827 = ssub.s32 %s27, 2
        // Predicated region
        $region69: #{tpu_custom_call.1} parent=67 // pred_check
          %p828 = pneg %p260
        $region70: #{tpu_custom_call.1} parent=67 // pred_check_branch
          %830 = sbr.rel (%p828) target = $region72
        $region71: #{tpu_custom_call.1} parent=67 // pred_region
          %s831 = sand.u32 %s245, 1
          %s832 = scalar_lea.sflag [#allocation4], %s831
          %s833 = sand.u32 %s245, 1
          %s834 = smul.addr %s833, 64
          %s835 = scalar_lea.vmem [#allocation7], %s834
          %837 = dma.done %s832, 1024
        $region72: #{tpu_custom_call.1} parent=67 // pred_fallthru
          _
        // Predicated region
        $region73: #{tpu_custom_call.1} parent=67 // pred_check
          %p838 = pneg %p288
        $region74: #{tpu_custom_call.1} parent=67 // pred_check_branch
          %840 = sbr.rel (%p838) target = $region76
        $region75: #{tpu_custom_call.1} parent=67 // pred_region
          %s841 = sand.u32 %s273, 1
          %s842 = scalar_lea.sflag [#allocation9], %s841
          %s843 = sand.u32 %s273, 1
          %s844 = smul.addr %s843, 64
          %s845 = scalar_lea.vmem [#allocation8], %s844
          %847 = dma.done %s842, 1024
        $region76: #{tpu_custom_call.1} parent=67 // pred_fallthru
          _
      $region68: #{tpu_custom_call.1} parent=5 // pred_fallthru
        _
    $region6: #{tpu_custom_call.1} parent=1 // loop_footer
      %s31 = sadd.s32 1, %s27
    $region7: #{tpu_custom_call.1} parent=1 // loop_footer_branch
      %26 = sbr.rel target = $region3
    $region8: #{tpu_custom_call.1} parent=1 // loop_exit
      _
    %848 = vsyncpa [#allocation3], 1
    %s849 = scalar_lea.sflag [#allocation3], 1
    %850 = vsyncpa %s849, 1
    %851 = vsyncpa [#allocation6], 1
    %s852 = scalar_lea.sflag [#allocation6], 1
    %853 = vsyncpa %s852, 1
    %854 = vsyncpa [#allocation4], 1
    %s855 = scalar_lea.sflag [#allocation4], 1
    %856 = vsyncpa %s855, 1
    %857 = vsyncpa [#allocation9], 1
    %s858 = scalar_lea.sflag [#allocation9], 1
    %859 = vsyncpa %s858, 1

</llo_original>
